<compile_context>
chip_gen: v6e
topology: v6e:2x2x1
jax: 0.10.0
libtpu: 0.0.40
codegen_flags: <defaults>
</compile_context>

<pallas_src>
import jax
import jax.numpy as jnp
from jax import lax
from jax.experimental import pallas as pl
from jax.experimental.pallas import tpu as pltpu


# ---------------------------------------------------------------------------
# Tunables / budgets (conservative across v5e / v6e / v7x).
# ---------------------------------------------------------------------------
_FAST_PATH_MAX_VOCAB = 1024              # keeps one-hot MXU work << HBM roofline
_FAST_PATH_MAX_TABLE_BYTES = 4 * 1024 * 1024
_OUT_BLOCK_BUDGET_BYTES = 8 * 1024 * 1024  # double-buffered (tile_n, E) block
_MAX_TILE_N = 1024                       # grid-step overhead amortization cap
_FAST_PATH_MAX_TILE_N = 512              # bounds the (tile_n, V) one-hot tile
_DMA_WINDOW = 16                         # in-flight row copies (large-table path)
_VMEM_LIMIT_BYTES = 32 * 1024 * 1024     # safe on all generations (v7x: 64 MiB phys)


def _round_up(x, m):
    return ((x + m - 1) // m) * m


# ---------------------------------------------------------------------------
# Fast path: table resident in VMEM, one-hot MXU gather (no per-row DMAs).
# ---------------------------------------------------------------------------
def _vmem_onehot_kernel(ids_ref, table_ref, out_ref):
    # ids_ref  : (tile_n, 1) int32 VMEM block of token ids
    # table_ref: (V, E)      VMEM-resident embedding table (fetched once)
    # out_ref  : (tile_n, E) VMEM output block
    ids = ids_ref[...]                                   # (tile_n, 1)
    tile_n = ids.shape[0]
    vocab = table_ref.shape[0]
    col = lax.broadcasted_iota(jnp.int32, (tile_n, vocab), 1)
    onehot = (col == ids).astype(table_ref.dtype)        # (tile_n, V)
    out_ref[...] = jnp.dot(
        onehot, table_ref[...], preferred_element_type=jnp.float32
    ).astype(out_ref.dtype)


# ---------------------------------------------------------------------------
# General path: table in HBM, windowed per-row DMA gather.
# ---------------------------------------------------------------------------
def _hbm_dma_gather_kernel(ids_ref, table_hbm, out_ref, sems):
    # ids_ref  : (tile_n,) int32 SMEM block of token ids for this tile
    # table_hbm: (V, E) embedding table left in HBM (memory_space=pl.ANY)
    # out_ref  : (tile_n, E) VMEM output block
    # sems     : (W,) DMA semaphores -- rolling in-flight window
    tile_n = out_ref.shape[0]
    w = sems.shape[0]

    def _wait_one(slot):
        # Every row copy moves exactly E * itemsize bytes, so a descriptor
        # built from row 0 is byte-count-equivalent for the semaphore wait.
        pltpu.make_async_copy(
            table_hbm.at[pl.ds(0, 1), :],
            out_ref.at[pl.ds(0, 1), :],
            sems.at[slot],
        ).wait()

    @pl.loop(0, tile_n)
    def _issue(r):
        slot = r % w

        @pl.when(r >= w)
        def _():
            _wait_one(slot)          # retire the copy that last used this slot

        pltpu.make_async_copy(
            table_hbm.at[pl.ds(ids_ref[r], 1), :],   # ids pre-clamped in wrapper
            out_ref.at[pl.ds(r, 1), :],
            sems.at[slot],
        ).start()

    # Drain: exactly one copy is still outstanding per semaphore slot.
    @pl.loop(0, w)
    def _drain(slot):
        _wait_one(slot)


# ---------------------------------------------------------------------------
# Wrapper
# ---------------------------------------------------------------------------
def token_embedding(ids, table):
    """ids: (B, S) int, table: (V, E) float -> (B, S, E) (row gather)."""
    B, S = ids.shape
    V, E = table.shape
    N = B * S

    dtype_bytes = jnp.dtype(table.dtype).itemsize
    row_bytes = E * dtype_bytes
    table_bytes = V * row_bytes

    # PyTorch raises on out-of-range ids; an unchecked gather must never read
    # OOB, so clamp once here (vectorized, fuses with the reshape/cast).
    ids_flat = jnp.clip(ids.reshape(N).astype(jnp.int32), 0, V - 1)

    use_fast = (V <= _FAST_PATH_MAX_VOCAB
                and table_bytes <= _FAST_PATH_MAX_TABLE_BYTES)

    # --- token-tile size -------------------------------------------------
    # Only large VMEM consumer is the double-buffered (tile_n, E) output
    # block; keep it ~<= 8 MiB, cap for grid-step amortization, and keep at
    # least 2 grid steps so both v7x TensorCores get work.
    tile_n = max(8, _OUT_BLOCK_BUDGET_BYTES // (2 * row_bytes))
    tile_n = min(tile_n, _MAX_TILE_N)
    if use_fast:
        tile_n = min(tile_n, _FAST_PATH_MAX_TILE_N)
    tile_n = min(tile_n, _round_up(pl.cdiv(N, 2), 8))
    tile_n = max(8, (tile_n // 8) * 8)

    n_blocks = pl.cdiv(N, tile_n)
    n_pad = n_blocks * tile_n
    # Only the tiny int32 id vector is padded; the (N, E) output keeps its
    # natural shape (no pad-then-slice HBM round trip on the big array).
    ids_padded = jnp.pad(ids_flat, (0, n_pad - N)) if n_pad != N else ids_flat

    cparams = pltpu.CompilerParams(
        dimension_semantics=("parallel",),        # megacore split on v7x
        vmem_limit_bytes=_VMEM_LIMIT_BYTES,
    )
    out_shape = jax.ShapeDtypeStruct((N, E), table.dtype)

    if use_fast:
        out = pl.pallas_call(
            _vmem_onehot_kernel,
            out_shape=out_shape,
            grid=(n_blocks,),
            in_specs=[
                pl.BlockSpec((tile_n, 1), lambda i: (i, 0)),
                pl.BlockSpec((V, E), lambda i: (0, 0)),   # table resident in VMEM
            ],
            out_specs=pl.BlockSpec((tile_n, E), lambda i: (i, 0)),
            compiler_params=cparams,
        )(ids_padded.reshape(n_pad, 1), table)
    else:
        window = min(_DMA_WINDOW, tile_n)
        out = pl.pallas_call(
            _hbm_dma_gather_kernel,
            out_shape=out_shape,
            grid_spec=pltpu.PrefetchScalarGridSpec(
                num_scalar_prefetch=0,
                grid=(n_blocks,),
                in_specs=[
                    # Blocked SMEM ids: only tile_n int32 resident per step.
                    pl.BlockSpec((tile_n,), lambda i: (i,),
                                 memory_space=pltpu.MemorySpace.SMEM),
                    pl.BlockSpec(memory_space=pl.ANY),    # table stays in HBM
                ],
                out_specs=pl.BlockSpec((tile_n, E), lambda i: (i, 0)),
                scratch_shapes=[pltpu.SemaphoreType.DMA((window,))],
            ),
            compiler_params=cparams,
        )(ids_padded, table)

    return out.reshape(B, S, E)


if __name__ == "__main__":
    key = jax.random.PRNGKey(0)
    k_tab, k_ids, k_tab2, k_ids2 = jax.random.split(key, 4)

    batch, seq = 2, 8

    # --- small-vocab fast path (VMEM-resident table, one-hot MXU gather) ---
    vocab, emb = 64, 32
    table = jax.random.normal(k_tab, (vocab, emb), dtype=jnp.float32)
    ids = jax.random.randint(k_ids, (batch, seq), 0, vocab, dtype=jnp.int32)
    out = jax.block_until_ready(token_embedding(ids, table))
    assert out.shape == (batch, seq, emb)
    assert out.dtype == table.dtype
    assert jnp.allclose(out, table[ids], atol=1e-6, rtol=1e-6)

    # --- large-vocab path (HBM-resident table, windowed row-DMA gather) ---
    vocab2, emb2 = 4096, 128
    table2 = jax.random.normal(k_tab2, (vocab2, emb2), dtype=jnp.float32)
    ids2 = jax.random.randint(k_ids2, (batch, seq), 0, vocab2, dtype=jnp.int32)
    out2 = jax.block_until_ready(token_embedding(ids2, table2))
    assert out2.shape == (batch, seq, emb2)
    assert jnp.allclose(out2, table2[ids2], atol=1e-6, rtol=1e-6)

    print("KERNEL_OK")
</pallas_src>

<mosaic_0001>
module attributes {stable_mosaic.version = 11 : i64} {
  func.func @_vmem_onehot_kernel(%arg0: i32, %arg1: memref<8x1xi32, #tpu.memory_space<vmem>>, %arg2: memref<64x32xf32, #tpu.memory_space<vmem>>, %arg3: memref<8x32xf32, #tpu.memory_space<vmem>>) attributes {dimension_semantics = [#tpu.dimension_semantics<parallel>], iteration_bounds = array<i64: 2>, scalar_prefetch = 0 : i64, scratch_operands = 0 : i64, tpu.core_type = #tpu.core_type<tc>, window_params = [{transform_indices = @transform_0, window_bounds = array<i64: 8, 1>}, {pipeline_mode = #tpu.pipeline_mode<synchronous>, transform_indices = @transform_1, window_bounds = array<i64: 64, 32>}, {transform_indices = @transform_2, window_bounds = array<i64: 8, 32>}]} {
    %c0 = arith.constant 0 : index
    %c0_0 = arith.constant 0 : index
    %0 = vector.load %arg1[%c0, %c0_0] : memref<8x1xi32, #tpu.memory_space<vmem>>, vector<8x1xi32>
    %1 = tpu.iota {dimensions = array<i32: 1>} : vector<8x64xi32>
    %2 = vector.broadcast %0 : vector<8x1xi32> to vector<8x64xi32>
    %3 = arith.cmpi eq, %1, %2 : vector<8x64xi32>
    %4 = arith.extui %3 : vector<8x64xi1> to vector<8x64xi32>
    %5 = arith.sitofp %4 : vector<8x64xi32> to vector<8x64xf32>
    %c0_1 = arith.constant 0 : index
    %c0_2 = arith.constant 0 : index
    %6 = vector.load %arg2[%c0_1, %c0_2] : memref<64x32xf32, #tpu.memory_space<vmem>>, vector<64x32xf32>
    %cst = arith.constant dense<0.000000e+00> : vector<8x32xf32>
    %7 = tpu.matmul %5, %6, %cst {dimension_numbers = #tpu.dot_dimension_numbers<[1], [0], [0], [1], [0, 0, 1, 1], [], []>} : vector<8x64xf32>, vector<64x32xf32>, vector<8x32xf32> -> vector<8x32xf32>
    %c0_3 = arith.constant 0 : index
    %c0_4 = arith.constant 0 : index
    %8 = vector.load %arg3[%c0_3, %c0_4] : memref<8x32xf32, #tpu.memory_space<vmem>>, vector<8x32xf32>
    tpu.vector_store %arg3[%c0_3, %c0_4], %7 {strides = array<i32>} : memref<8x32xf32, #tpu.memory_space<vmem>>, vector<8x32xf32>,
    return
  }
  func.func @transform_0(%arg0: i32) -> (i32, i32) {
    %c0_i32 = arith.constant 0 : i32
    %c0_i32_0 = arith.constant 0 : i32
    return %arg0, %c0_i32 : i32, i32
  }
  func.func @transform_1(%arg0: i32) -> (i32, i32) {
    %c0_i32 = arith.constant 0 : i32
    %c0_i32_0 = arith.constant 0 : i32
    %c0_i32_1 = arith.constant 0 : i32
    return %c0_i32, %c0_i32_0 : i32, i32
  }
  func.func @transform_2(%arg0: i32) -> (i32, i32) {
    %c0_i32 = arith.constant 0 : i32
    %c0_i32_0 = arith.constant 0 : i32
    return %arg0, %c0_i32 : i32, i32
  }
}

</mosaic_0001>

<llo_original>
// kernel: tpu_custom_call.1
$region0: #{tpu_custom_call.1}
  #allocation0 [shape = 'u32[]', space=smem, size = 0x4, offset = 0x4, fixed_abs, tag = 'smem constant byte address 0x4 - core index']
  #allocation1 [shape = 'u32[144,128]{1,0:T(1,128)}', space=vmem, size = 0x12000, scoped, tag = 'internal scratch']
  %s0 = inlined_call_operand.vmem [shape: s32[16,1], index: 0, kind: input, shape index: {}]
  %s1 = inlined_call_operand.vmem [shape: f32[64,32], index: 1, kind: input, shape index: {}]
  %s2 = inlined_call_operand.hbm [shape: f32[16,32], index: 2, kind: output, shape index: {}]
  %s3 = sld [smem:[#allocation0]]
  $region41: #{tpu_custom_call.1} parent=0
    _
  %s5 = ssub.s32 1, %s3
  %s6 = scalar_select 0, %s5, %s3
  $region1: #{tpu_custom_call.1} parent=0
    #allocation2 [shape = 'u8[8192]{0}', space=vmem, size = 0x2000, scoped, tag = 'output window, operand 0']
    #allocation3 [shape = 's32[2]{0}', space=sflag, size = 0x8, scoped, tag = 'scoped memory for tpu_custom_call.1']
    %7 = vsyncpa [#allocation3], 0
    %s8 = scalar_lea.sflag [#allocation3], 1
    %9 = vsyncpa %s8, 0
    loop: start=0, step=1, limit=4
    $region2: #{tpu_custom_call.1} parent=1 // loop_pre_header
      _
    $region3: #{tpu_custom_call.1} parent=1 // loop_header
      %s11 = sphi 0, %s15
      %p12 = scmp.ge.s32.totalorder %s11, 4
      %s21 = sphi 0, %s23
      %s24 = sphi 0, %s21
      %s25 = sphi 0, %s24
      %s41 = sphi 0, %s25
      %s45 = sphi 0, %s45
      %s47 = sphi 0, %s45
      %s48 = sphi 0, %s47
      %s62 = sphi 0, %s48
      %s68 = sphi 0, %s70
      %s71 = sphi 0, %s68
      %s72 = sphi 0, %s71
      %s88 = sphi 0, %s72
    $region4: #{tpu_custom_call.1} parent=1 // loop_header_branch
      %14 = sbr.rel (%p12) target = $region8
    $region5: #{tpu_custom_call.1} parent=1 // loop_body
      %s16 = ssub.s32 %s11, 1
      %s17 = ssub.s32 %s11, 2
      %s18 = sadd.s32 %s11, 1
      %s19 = ssub.s32 %s11, %s18
      %p20 = scmp.eq.s32.totalorder %s19, 0
      %s22 = sadd.s32 %s21, 1
      %s23 = scalar_select %p20, %s21, %s22
      %p26 = pneg %p20
      %p27 = scmp.eq.s32.totalorder %s11, 1
      %p28 = por %p26, %p27
      %p29 = scmp.ne.s32.totalorder %s21, %s24
      %p30 = scmp.eq.s32.totalorder %s11, 0
      %p31 = por %p29, %p30
      %p32 = scmp.ne.s32.totalorder %s21, %s24
      %p33 = scmp.eq.s32.totalorder %s16, 1
      %p34 = por %p32, %p33
      %p35 = scmp.ne.s32.totalorder %s24, %s25
      %p36 = scmp.eq.s32.totalorder %s16, 0
      %p37 = por %p35, %p36
      %p38 = scmp.ne.s32.totalorder %s24, %s25
      %p39 = scmp.eq.s32.totalorder %s17, 1
      %p40 = por %p38, %p39
      %p42 = scmp.ne.s32.totalorder %s25, %s41
      %p43 = scmp.eq.s32.totalorder %s17, 0
      %p44 = por %p42, %p43
      %s46 = sadd.s32 %s45, 1
      %p49 = scmp.eq.s32.totalorder %s11, 1
      %p50 = scmp.ne.s32.totalorder %s45, %s47
      %p51 = scmp.eq.s32.totalorder %s11, 0
      %p52 = por %p50, %p51
      %p53 = scmp.ne.s32.totalorder %s45, %s47
      %p54 = scmp.eq.s32.totalorder %s16, 1
      %p55 = por %p53, %p54
      %p56 = scmp.ne.s32.totalorder %s47, %s48
      %p57 = scmp.eq.s32.totalorder %s16, 0
      %p58 = por %p56, %p57
      %p59 = scmp.ne.s32.totalorder %s47, %s48
      %p60 = scmp.eq.s32.totalorder %s17, 1
      %p61 = por %p59, %p60
      %p63 = scmp.ne.s32.totalorder %s48, %s62
      %p64 = scmp.eq.s32.totalorder %s17, 0
      %p65 = por %p63, %p64
      %s66 = ssub.s32 %s11, %s18
      %p67 = scmp.eq.s32.totalorder %s66, 0
      %s69 = sadd.s32 %s68, 1
      %s70 = scalar_select %p67, %s68, %s69
      %p73 = pneg %p67
      %p74 = scmp.eq.s32.totalorder %s11, 1
      %p75 = por %p73, %p74
      %p76 = scmp.ne.s32.totalorder %s68, %s71
      %p77 = scmp.eq.s32.totalorder %s11, 0
      %p78 = por %p76, %p77
      %p79 = scmp.ne.s32.totalorder %s68, %s71
      %p80 = scmp.eq.s32.totalorder %s16, 1
      %p81 = por %p79, %p80
      %p82 = scmp.ne.s32.totalorder %s71, %s72
      %p83 = scmp.eq.s32.totalorder %s16, 0
      %p84 = por %p82, %p83
      %p85 = scmp.ne.s32.totalorder %s71, %s72
      %p86 = scmp.eq.s32.totalorder %s17, 1
      %p87 = por %p85, %p86
      %p89 = scmp.ne.s32.totalorder %s72, %s88
      %p90 = scmp.eq.s32.totalorder %s17, 0
      %p91 = por %p89, %p90
      %p92 = scmp.le.s32.totalorder 1, %s11
      %p93 = scmp.lt.s32.totalorder %s11, 3
      %p94 = pnand %p92, %p93
      %p95 = pneg %p94
      // Predicated region
      $region9: #{tpu_custom_call.1} parent=5 // pred_check
        _
      $region10: #{tpu_custom_call.1} parent=5 // pred_check_branch
        %97 = sbr.rel (%p94) target = $region12
      $region11: #{tpu_custom_call.1} parent=5 // pred_region
        %s98 = ssub.s32 %s11, 1
        // Predicated region
        $region13: #{tpu_custom_call.1} parent=11 // pred_check
          %p99 = pneg %p58
        $region14: #{tpu_custom_call.1} parent=11 // pred_check_branch
          %101 = sbr.rel (%p99) target = $region16
        $region15: #{tpu_custom_call.1} parent=11 // pred_region
          _
        $region16: #{tpu_custom_call.1} parent=11 // pred_fallthru
          _
      $region12: #{tpu_custom_call.1} parent=5 // pred_fallthru
        _
      %p102 = scmp.lt.s32.totalorder %s11, 2
      // Predicated region
      $region17: #{tpu_custom_call.1} parent=5 // pred_check
        %p103 = pneg %p102
      $region18: #{tpu_custom_call.1} parent=5 // pred_check_branch
        %105 = sbr.rel (%p103) target = $region20
      $region19: #{tpu_custom_call.1} parent=5 // pred_region
        // Predicated region
        $region21: #{tpu_custom_call.1} parent=19 // pred_check
          %p106 = pneg %p31
        $region22: #{tpu_custom_call.1} parent=19 // pred_check_branch
          %108 = sbr.rel (%p106) target = $region24
        $region23: #{tpu_custom_call.1} parent=19 // pred_region
          %p109 = scmp.lt.s32.totalorder %s11, 1
          %s110 = scalar_select %p109, %s11, 1
          %s111 = smul.addr %s110, 8
          %s112 = scalar_lea.vmem %s0, %s111
        $region24: #{tpu_custom_call.1} parent=19 // pred_fallthru
          _
      $region20: #{tpu_custom_call.1} parent=5 // pred_fallthru
        _
      %p113 = scmp.le.s32.totalorder 1, %s11
      %p114 = scmp.lt.s32.totalorder %s11, 3
      %p115 = pnand %p113, %p114
      %p116 = pneg %p115
      // Predicated region
      $region25: #{tpu_custom_call.1} parent=5 // pred_check
        _
      $region26: #{tpu_custom_call.1} parent=5 // pred_check_branch
        %118 = sbr.rel (%p115) target = $region28
      $region27: #{tpu_custom_call.1} parent=5 // pred_region
        %s119 = ssub.s32 %s11, 1
        %p120 = scmp.lt.s32.totalorder %s16, 1
        %s121 = scalar_select %p120, %s16, 1
        %s122 = smul.addr %s121, 8
        %s123 = scalar_lea.vmem %s0, %s122
        %p124 = pneg %p37
        %p125 = pneg %p34
        %p126 = pneg %p58
        %p127 = pneg %p55
        %p128 = pneg %p84
        %p129 = pneg %p81
        %s130 = sand.u32 %s71, 1
        %s131 = scalar_lea.sflag [#allocation3], %s130
        %s132 = sand.u32 %s71, 1
        %s133 = smul.addr %s132, 8
        %s134 = scalar_lea.vmem [#allocation2], %s133
        %p135 = scmp.lt.s32.totalorder %s16, 1
        %s136 = scalar_select %p135, %s16, 1
        %s137 = smul.addr %s136, 8
        %s138 = scalar_lea.vmem %s0, %s137
        %v139 = vld [vmem:[%s138] sm:$0xff]
        %v140 = vlaneseq
        %v141 = vand.u32 %v140, 127
        %142 = vset.pattern.permute.xlu0 0
        %143 = vperm.xlu0 %142, %v139
        %v144 = vpop.permute.xlu0 %143
        %vm145 = vcmp.eq.s32.totalorder %v141, %v144
        %v146 = vsel %vm145, 1, 0
        %v147 = vcvt.s32.f32 %v146
        %v148 = vld [vmem:[%s1] sm:$0xff]
        %v149 = vld [vmem:[%s1 + $0x8] sm:$0xff]
        %v150 = vld [vmem:[%s1 + $0x10] sm:$0xff]
        %v151 = vld [vmem:[%s1 + $0x18] sm:$0xff]
        %v152 = vld [vmem:[%s1 + $0x20] sm:$0xff]
        %v153 = vld [vmem:[%s1 + $0x28] sm:$0xff]
        %v154 = vld [vmem:[%s1 + $0x30] sm:$0xff]
        %v155 = vld [vmem:[%s1 + $0x38] sm:$0xff]
        %vm156 = vcmask 523264
        %v158 = vsel %vm156, %v147, 0
        %160 = vmatprep.subr.mxu0 0.0
        %161 = vmatpush1.msra.mxu0 0.0
        %162 = vmatprep.subr.mxu0 0.0
        %163 = vmatpush1.msra.mxu0 0.0
        %164 = vmatprep.subr.mxu0 0.0
        %165 = vmatpush1.msra.mxu0 0.0
        %166 = vmatprep.subr.mxu0 0.0
        %167 = vmatpush1.msra.mxu0 0.0
        %168 = vmatprep.subr.mxu0 0.0
        %169 = vmatpush1.msra.mxu0 0.0
        %170 = vmatprep.subr.mxu0 0.0
        %171 = vmatpush1.msra.mxu0 0.0
        %172 = vmatprep.subr.mxu0 0.0
        %173 = vmatpush1.msra.mxu0 0.0
        %174 = vmatprep.subr.mxu0 0.0
        %175 = vmatpush1.msra.mxu0 0.0
        %176 = vmatprep.subr.mxu0 0.0
        %177 = vmatpush1.msra.mxu0 %v155
        %178 = vmatprep.subr.mxu0 0.0
        %179 = vmatpush1.msra.mxu0 %v154
        %180 = vmatprep.subr.mxu0 0.0
        %181 = vmatpush1.msra.mxu0 %v153
        %182 = vmatprep.subr.mxu0 0.0
        %183 = vmatpush1.msra.mxu0 %v152
        %184 = vmatprep.subr.mxu0 0.0
        %185 = vmatpush1.msra.mxu0 %v151
        %186 = vmatprep.subr.mxu0 0.0
        %187 = vmatpush1.msra.mxu0 %v150
        %188 = vmatprep.subr.mxu0 0.0
        %189 = vmatpush1.msra.mxu0 %v149
        %190 = vmatprep.subr.mxu0 0.0
        %191 = vmatpush1.msra.mxu0 %v148
        %192 = vmatprep.subr.mxu0 0.0
        %193 = vmatpush2.msra.mxu0 0.0
        %194 = vmatprep.subr.mxu0 0.0
        %195 = vmatpush2.msra.mxu0 0.0
        %196 = vmatprep.subr.mxu0 0.0
        %197 = vmatpush2.msra.mxu0 0.0
        %198 = vmatprep.subr.mxu0 0.0
        %199 = vmatpush2.msra.mxu0 0.0
        %200 = vmatprep.subr.mxu0 0.0
        %201 = vmatpush2.msra.mxu0 0.0
        %202 = vmatprep.subr.mxu0 0.0
        %203 = vmatpush2.msra.mxu0 0.0
        %204 = vmatprep.subr.mxu0 0.0
        %205 = vmatpush2.msra.mxu0 0.0
        %206 = vmatprep.subr.mxu0 0.0
        %207 = vmatpush2.msra.mxu0 0.0
        %208 = vmatprep.subr.mxu0 0.0
        %209 = vmatpush2.msra.mxu0 0.0
        %210 = vmatprep.subr.mxu0 0.0
        %211 = vmatpush2.msra.mxu0 0.0
        %212 = vmatprep.subr.mxu0 0.0
        %213 = vmatpush2.msra.mxu0 0.0
        %214 = vmatprep.subr.mxu0 0.0
        %215 = vmatpush2.msra.mxu0 0.0
        %216 = vmatprep.subr.mxu0 0.0
        %217 = vmatpush2.msra.mxu0 0.0
        %218 = vmatprep.subr.mxu0 0.0
        %219 = vmatpush2.msra.mxu0 0.0
        %220 = vmatprep.subr.mxu0 0.0
        %221 = vmatpush2.msra.mxu0 0.0
        %222 = vmatprep.subr.mxu0 0.0
        %223 = vmatpush2.msra.mxu0 0.0
        %224 = vmatprep.mubr.f32.mxu0 0.0
        %225 = vmatmul.mubr.f32.gmra.mxu0 %v158
        %v226 = vpop.f32.mrf.mxu0
        %v227 = vadd.f32 0.0, %v226
        %v228 = vpop.f32.mrf.mxu0
        %229 = vdwg.mxu0
        %vm230 = vcmask 261120
        %231 = vst.msk [vmem:[%s134] sm:$0xff] %vm230, %v227
        %s232 = sand.u32 %s71, 1
        %s233 = scalar_lea.sflag [#allocation3], %s232
        %s234 = sand.u32 %s71, 1
        %s235 = smul.addr %s234, 8
        %s236 = scalar_lea.vmem [#allocation2], %s235
        // Predicated region
        $region29: #{tpu_custom_call.1} parent=27 // pred_check
          %p237 = pneg %p81
        $region30: #{tpu_custom_call.1} parent=27 // pred_check_branch
          %239 = sbr.rel (%p237) target = $region32
        $region31: #{tpu_custom_call.1} parent=27 // pred_region
          %s241 = ssub.s32 128, 128
          %242 = vsyncadd %s233, %s241
          %s243 = smul.addr %s16, 128
          %s244 = scalar_lea.hbm %s2, %s243
          %s246 = sshll.u32 %s236, 4
          %s247 = int_to_ptr.vmem [resolvable:$true] %s246
          %249 = dma.vmem_to_hbm [thread:$0]  %s247, 128, %s244, %s233
        $region32: #{tpu_custom_call.1} parent=27 // pred_fallthru
          _
      $region28: #{tpu_custom_call.1} parent=5 // pred_fallthru
        _
      %p250 = scmp.le.s32.totalorder 2, %s11
      // Predicated region
      $region33: #{tpu_custom_call.1} parent=5 // pred_check
        %p251 = pneg %p250
      $region34: #{tpu_custom_call.1} parent=5 // pred_check_branch
        %253 = sbr.rel (%p251) target = $region36
      $region35: #{tpu_custom_call.1} parent=5 // pred_region
        %s254 = ssub.s32 %s11, 2
        // Predicated region
        $region37: #{tpu_custom_call.1} parent=35 // pred_check
          %p255 = pneg %p87
        $region38: #{tpu_custom_call.1} parent=35 // pred_check_branch
          %257 = sbr.rel (%p255) target = $region40
        $region39: #{tpu_custom_call.1} parent=35 // pred_region
          %s258 = sand.u32 %s72, 1
          %s259 = scalar_lea.sflag [#allocation3], %s258
          %s260 = sand.u32 %s72, 1
          %s261 = smul.addr %s260, 8
          %s262 = scalar_lea.vmem [#allocation2], %s261
          %263 = dma.done %s259, 128
        $region40: #{tpu_custom_call.1} parent=35 // pred_fallthru
          _
      $region36: #{tpu_custom_call.1} parent=5 // pred_fallthru
        _
    $region6: #{tpu_custom_call.1} parent=1 // loop_footer
      %s15 = sadd.s32 1, %s11
    $region7: #{tpu_custom_call.1} parent=1 // loop_footer_branch
      %10 = sbr.rel target = $region3
    $region8: #{tpu_custom_call.1} parent=1 // loop_exit
      _
    %264 = vsyncpa [#allocation3], 1
    %s265 = scalar_lea.sflag [#allocation3], 1
    %266 = vsyncpa %s265, 1

</llo_original>
